<compile_context>
chip_gen: v7x
topology: tpu7x:2x2x1
jax: 0.10.0
libtpu: 0.0.40
codegen_flags: <defaults>
</compile_context>

<pallas_src>
import functools

import jax
import jax.numpy as jnp
from jax import lax
from jax.experimental import pallas as pl
from jax.experimental.pallas import tpu as pltpu

DROPOUT_P = 0.1
C_PAD = 128           # lane-dense padded class dimension
NEG_INF = -1e30       # value for padded logit lanes (exp() underflows to 0)


def _round_up(x, m):
    return ((x + m - 1) // m) * m


def _choose_tiling(batch):
    """Batch tile size and padded batch. tm is sized for (8,128) alignment;
    at real scale keep 2*tm*S*H*4B + H*C_PAD*4B + 2*tm*C_PAD*4B well under the
    32 MiB scoped VMEM budget (v7x has only 64 MiB physical VMEM)."""
    tm = 128 if batch >= 128 else _round_up(batch, 8)
    return tm, _round_up(batch, tm)


def _dropout_scale(key, bpad):
    """Precomputed dropout scale mask: keep/(1-p) or 0, shape (bpad, C_PAD)."""
    keep = jax.random.bernoulli(key, 1.0 - DROPOUT_P, (bpad, C_PAD))
    return keep.astype(jnp.float32) / (1.0 - DROPOUT_P)


def _weighted_ce_kernel(emb_ref, mask_ref, w_ref, b_ref, cw_ref, drop_ref,
                        labels_ref, logits_ref, stats_ref, *, num_classes):
    """One batch tile: fused mean-pool -> classifier matmul -> dropout ->
    log-softmax -> per-row weighted-CE partials.

    emb_ref:(TM,S,H) mask_ref:(TM,S,1) w_ref:(H,CPAD) b_ref/cw_ref:(1,CPAD)
    drop_ref:(TM,CPAD) labels_ref:(TM,1) -> logits_ref:(TM,CPAD)
    stats_ref:(TM,CPAD) with lane0 = w_i*logp[y_i], lane1 = w_i."""
    TM = logits_ref.shape[0]

    # ---- base_model tail: attention-mask-weighted mean pooling -------------
    m3 = mask_ref[...]                                          # (TM, S, 1)
    msum = jnp.maximum(jnp.sum(m3, axis=1), 1.0)                # (TM, 1)
    pooled = jnp.sum(emb_ref[...] * m3, axis=1) / msum          # (TM, H)

    # ---- classifier head: MXU matmul + bias ---------------------------------
    raw = jnp.dot(pooled, w_ref[...],
                  preferred_element_type=jnp.float32) + b_ref[...]   # (TM, CPAD)

    # ---- dropout (precomputed scale mask) + force padded lanes to -inf -----
    lane = lax.broadcasted_iota(jnp.int32, (TM, C_PAD), 1)
    dropped = raw * drop_ref[...]
    logits = jnp.where(lane < num_classes, dropped, NEG_INF)
    logits_ref[...] = logits                                    # lane-dense store

    # ---- weighted cross-entropy terms ---------------------------------------
    mx = jnp.max(logits, axis=1, keepdims=True)
    z = logits - mx
    lse = jnp.log(jnp.sum(jnp.exp(z), axis=1, keepdims=True))
    logp = z - lse                                              # (TM, CPAD)

    onehot = (lane == labels_ref[...]).astype(jnp.float32)      # (TM, CPAD)
    picked = jnp.sum(logp * onehot, axis=1, keepdims=True)      # (TM, 1) logp[y_i]
    w_i = jnp.sum(cw_ref[...] * onehot, axis=1, keepdims=True)  # (TM, 1) weight[y_i]

    # per-row partials (lane0: numerator term, lane1: denominator term);
    # reduced in the wrapper so the batch grid axis stays "parallel".
    stats_ref[...] = jnp.where(lane == 0, w_i * picked,
                               jnp.where(lane == 1, w_i, 0.0))


def weighted_loss_model_forward(input_ids, attention_mask, labels, params,
                                dropout_key):
    W, b, cw, emb_table = (params["W"], params["b"],
                           params["class_weights"], params["emb"])
    B, S = input_ids.shape
    H = emb_table.shape[1]
    C = W.shape[1]
    assert C <= C_PAD

    TM, Bpad = _choose_tiling(B)
    n_tiles = Bpad // TM

    # TODO(synk): embedding row-gather stays in plain JAX; a Pallas version
    # would need data-dependent DMA gather (pl.ANY + make_async_copy).
    emb = emb_table[input_ids].astype(jnp.float32)               # (B, S, H)
    mask3 = attention_mask.astype(jnp.float32)[..., None]        # (B, S, 1)

    # Pad batch to a multiple of TM (padded rows: zero features / label -1 so
    # their class weight is 0 and they drop out of both loss sums).
    emb = jnp.pad(emb, ((0, Bpad - B), (0, 0), (0, 0)))
    mask3 = jnp.pad(mask3, ((0, Bpad - B), (0, 0), (0, 0)))
    labels2d = jnp.pad(labels.astype(jnp.int32), (0, Bpad - B),
                       constant_values=-1).reshape(Bpad, 1)

    # Pad class dimension to 128 lanes (padded class_weights = 0).
    W_p = jnp.pad(W.astype(jnp.float32), ((0, 0), (0, C_PAD - C)))
    b_p = jnp.pad(b.reshape(1, C).astype(jnp.float32), ((0, 0), (0, C_PAD - C)))
    cw_p = jnp.pad(cw.reshape(1, C).astype(jnp.float32), ((0, 0), (0, C_PAD - C)))

    drop_scale = _dropout_scale(dropout_key, Bpad)               # (Bpad, C_PAD)

    kernel = functools.partial(_weighted_ce_kernel, num_classes=C)
    flops = 2 * Bpad * S * H + 2 * Bpad * H * C_PAD + 10 * Bpad * C_PAD
    bytes_accessed = 4 * (Bpad * S * H + Bpad * S + H * C_PAD + 3 * C_PAD
                          + 3 * Bpad * C_PAD + Bpad)

    logits_pad, stats = pl.pallas_call(
        kernel,
        grid=(n_tiles,),
        in_specs=[
            pl.BlockSpec((TM, S, H), lambda i: (i, 0, 0)),    # emb tile
            pl.BlockSpec((TM, S, 1), lambda i: (i, 0, 0)),    # mask tile
            pl.BlockSpec((H, C_PAD), lambda i: (0, 0)),       # W (resident)
            pl.BlockSpec((1, C_PAD), lambda i: (0, 0)),       # b (resident)
            pl.BlockSpec((1, C_PAD), lambda i: (0, 0)),       # class_weights
            pl.BlockSpec((TM, C_PAD), lambda i: (i, 0)),      # dropout scale tile
            pl.BlockSpec((TM, 1), lambda i: (i, 0)),          # labels tile
        ],
        out_specs=(
            pl.BlockSpec((TM, C_PAD), lambda i: (i, 0)),      # logits (lane-dense)
            pl.BlockSpec((TM, C_PAD), lambda i: (i, 0)),      # per-row partials
        ),
        out_shape=(
            jax.ShapeDtypeStruct((Bpad, C_PAD), jnp.float32),
            jax.ShapeDtypeStruct((Bpad, C_PAD), jnp.float32),
        ),
        compiler_params=pltpu.CompilerParams(
            dimension_semantics=("parallel",)),
        cost_estimate=pl.CostEstimate(flops=flops,
                                      transcendentals=Bpad * C_PAD,
                                      bytes_accessed=bytes_accessed),
    )(emb, mask3, W_p, b_p, cw_p, drop_scale, labels2d)

    num = jnp.sum(stats[:B, 0])                 # sum_i w[y_i] * logp_i[y_i]
    den = jnp.sum(stats[:B, 1])                 # sum_i w[y_i]
    loss = -num / den                           # torch weighted 'mean' reduction
    logits = logits_pad[:B, :C]                 # dropped logits, as in PyTorch
    return loss, logits


def _reference(input_ids, attention_mask, labels, params, drop_scale):
    """Pure-JAX reference with the same dropout mask (for validation)."""
    emb = params["emb"][input_ids]
    m = attention_mask.astype(jnp.float32)[..., None]
    pooled = jnp.sum(emb * m, axis=1) / jnp.maximum(jnp.sum(m, axis=1), 1.0)
    logits = (pooled @ params["W"] + params["b"].reshape(1, -1)) * drop_scale
    logp = jax.nn.log_softmax(logits, axis=-1)
    w = params["class_weights"][labels]
    picked = jnp.take_along_axis(logp, labels[:, None], axis=1)[:, 0]
    loss = -jnp.sum(w * picked) / jnp.sum(w)
    return loss, logits


if __name__ == "__main__":
    B, S, H, C, V = 8, 8, 32, 4, 64   # batch, seq, hidden, classes, vocab

    key = jax.random.PRNGKey(0)
    k_emb, k_w, k_b, k_ids, k_lbl, k_drop = jax.random.split(key, 6)

    params = {
        "emb": jax.random.normal(k_emb, (V, H), jnp.float32) * 0.02,
        "W": jax.random.normal(k_w, (H, C), jnp.float32) * 0.1,
        "b": jax.random.normal(k_b, (1, C), jnp.float32) * 0.01,
        "class_weights": jnp.array([1.0, 2.0, 0.5, 1.5], jnp.float32),
    }

    input_ids = jax.random.randint(k_ids, (B, S), 0, V, dtype=jnp.int32)
    attention_mask = jnp.broadcast_to((jnp.arange(S) < 6).astype(jnp.int32),
                                      (B, S))                    # some padding
    labels = jax.random.randint(k_lbl, (B,), 0, C, dtype=jnp.int32)

    fwd = jax.jit(weighted_loss_model_forward)
    loss, logits = fwd(input_ids, attention_mask, labels, params, k_drop)
    jax.block_until_ready((loss, logits))

    # validate against a pure-JAX reference using the identical dropout mask
    _, Bpad = _choose_tiling(B)
    drop_valid = _dropout_scale(k_drop, Bpad)[:B, :C]
    ref_loss, ref_logits = _reference(input_ids, attention_mask, labels,
                                      params, drop_valid)

    assert logits.shape == (B, C)
    assert bool(jnp.isfinite(loss))
    assert jnp.allclose(loss, ref_loss, rtol=1e-3, atol=1e-3)
    assert jnp.allclose(logits, ref_logits, rtol=1e-3, atol=1e-3)
    print("KERNEL_OK")
</pallas_src>

<mosaic_0001>
module attributes {stable_mosaic.version = 11 : i64} {
  func.func @_weighted_ce_kernel(%arg0: i32, %arg1: memref<8x8x32xf32, #tpu.memory_space<vmem>>, %arg2: memref<8x8x1xf32, #tpu.memory_space<vmem>>, %arg3: memref<32x128xf32, #tpu.memory_space<vmem>>, %arg4: memref<1x128xf32, #tpu.memory_space<vmem>>, %arg5: memref<1x128xf32, #tpu.memory_space<vmem>>, %arg6: memref<8x128xf32, #tpu.memory_space<vmem>>, %arg7: memref<8x1xi32, #tpu.memory_space<vmem>>, %arg8: memref<8x128xf32, #tpu.memory_space<vmem>>, %arg9: memref<8x128xf32, #tpu.memory_space<vmem>>) attributes {dimension_semantics = [#tpu.dimension_semantics<parallel>], iteration_bounds = array<i64: 1>, scalar_prefetch = 0 : i64, scratch_operands = 0 : i64, tpu.core_type = #tpu.core_type<tc>, window_params = [{transform_indices = @transform_0, window_bounds = array<i64: 8, 8, 32>}, {transform_indices = @transform_1, window_bounds = array<i64: 8, 8, 1>}, {pipeline_mode = #tpu.pipeline_mode<synchronous>, transform_indices = @transform_2, window_bounds = array<i64: 32, 128>}, {pipeline_mode = #tpu.pipeline_mode<synchronous>, transform_indices = @transform_3, window_bounds = array<i64: 1, 128>}, {pipeline_mode = #tpu.pipeline_mode<synchronous>, transform_indices = @transform_4, window_bounds = array<i64: 1, 128>}, {transform_indices = @transform_5, window_bounds = array<i64: 8, 128>}, {transform_indices = @transform_6, window_bounds = array<i64: 8, 1>}, {transform_indices = @transform_7, window_bounds = array<i64: 8, 128>}, {transform_indices = @transform_8, window_bounds = array<i64: 8, 128>}]} {
    %c0 = arith.constant 0 : index
    %c0_0 = arith.constant 0 : index
    %c0_1 = arith.constant 0 : index
    %0 = vector.load %arg2[%c0, %c0_0, %c0_1] : memref<8x8x1xf32, #tpu.memory_space<vmem>>, vector<8x8x1xf32>
    %cst = arith.constant dense<0.000000e+00> : vector<8x1xf32>
    %1 = vector.multi_reduction <add>, %0, %cst [1] : vector<8x8x1xf32> to vector<8x1xf32>
    %cst_2 = arith.constant 1.000000e+00 : f32
    %2 = vector.broadcast %cst_2 : f32 to vector<8x1xf32>
    %3 = arith.maximumf %1, %2 : vector<8x1xf32>
    %c0_3 = arith.constant 0 : index
    %c0_4 = arith.constant 0 : index
    %c0_5 = arith.constant 0 : index
    %4 = vector.load %arg1[%c0_3, %c0_4, %c0_5] : memref<8x8x32xf32, #tpu.memory_space<vmem>>, vector<8x8x32xf32>
    %5 = vector.broadcast %0 : vector<8x8x1xf32> to vector<8x8x32xf32>
    %6 = arith.mulf %4, %5 : vector<8x8x32xf32>
    %cst_6 = arith.constant dense<0.000000e+00> : vector<8x32xf32>
    %7 = vector.multi_reduction <add>, %6, %cst_6 [1] : vector<8x8x32xf32> to vector<8x32xf32>
    %8 = vector.broadcast %3 : vector<8x1xf32> to vector<8x32xf32>
    %9 = arith.divf %7, %8 : vector<8x32xf32>
    %c0_7 = arith.constant 0 : index
    %c0_8 = arith.constant 0 : index
    %10 = vector.load %arg3[%c0_7, %c0_8] : memref<32x128xf32, #tpu.memory_space<vmem>>, vector<32x128xf32>
    %cst_9 = arith.constant dense<0.000000e+00> : vector<8x128xf32>
    %11 = tpu.matmul %9, %10, %cst_9 {dimension_numbers = #tpu.dot_dimension_numbers<[1], [0], [0], [1], [0, 0, 1, 1], [], []>} : vector<8x32xf32>, vector<32x128xf32>, vector<8x128xf32> -> vector<8x128xf32>
    %c0_10 = arith.constant 0 : index
    %c0_11 = arith.constant 0 : index
    %12 = vector.load %arg4[%c0_10, %c0_11] : memref<1x128xf32, #tpu.memory_space<vmem>>, vector<1x128xf32>
    %13 = vector.broadcast %12 : vector<1x128xf32> to vector<8x128xf32>
    %14 = arith.addf %11, %13 : vector<8x128xf32>
    %15 = tpu.iota {dimensions = array<i32: 1>} : vector<8x128xi32>
    %c0_12 = arith.constant 0 : index
    %c0_13 = arith.constant 0 : index
    %16 = vector.load %arg6[%c0_12, %c0_13] : memref<8x128xf32, #tpu.memory_space<vmem>>, vector<8x128xf32>
    %17 = arith.mulf %14, %16 : vector<8x128xf32>
    %c4_i32 = arith.constant 4 : i32
    %18 = vector.broadcast %c4_i32 : i32 to vector<8x128xi32>
    %19 = arith.cmpi slt, %15, %18 : vector<8x128xi32>
    %cst_14 = arith.constant -1.000000e+30 : f32
    %20 = vector.broadcast %cst_14 : f32 to vector<8x128xf32>
    %21 = arith.select %19, %17, %20 : vector<8x128xi1>, vector<8x128xf32>
    %c0_15 = arith.constant 0 : index
    %c0_16 = arith.constant 0 : index
    %22 = vector.load %arg8[%c0_15, %c0_16] : memref<8x128xf32, #tpu.memory_space<vmem>>, vector<8x128xf32>
    tpu.vector_store %arg8[%c0_15, %c0_16], %21 {strides = array<i32>} : memref<8x128xf32, #tpu.memory_space<vmem>>, vector<8x128xf32>,
    %cst_17 = arith.constant dense<0xFF800000> : vector<8xf32>
    %23 = vector.multi_reduction <maximumf>, %21, %cst_17 [1] : vector<8x128xf32> to vector<8xf32>
    %24 = vector.shape_cast %23 : vector<8xf32> to vector<8x1xf32>
    %25 = vector.broadcast %24 : vector<8x1xf32> to vector<8x128xf32>
    %26 = arith.subf %21, %25 : vector<8x128xf32>
    %27 = math.exp %26 : vector<8x128xf32>
    %cst_18 = arith.constant dense<0.000000e+00> : vector<8xf32>
    %28 = vector.multi_reduction <add>, %27, %cst_18 [1] : vector<8x128xf32> to vector<8xf32>
    %29 = vector.shape_cast %28 : vector<8xf32> to vector<8x1xf32>
    %30 = math.log %29 : vector<8x1xf32>
    %31 = vector.broadcast %30 : vector<8x1xf32> to vector<8x128xf32>
    %32 = arith.subf %26, %31 : vector<8x128xf32>
    %c0_19 = arith.constant 0 : index
    %c0_20 = arith.constant 0 : index
    %33 = vector.load %arg7[%c0_19, %c0_20] : memref<8x1xi32, #tpu.memory_space<vmem>>, vector<8x1xi32>
    %34 = vector.broadcast %33 : vector<8x1xi32> to vector<8x128xi32>
    %35 = arith.cmpi eq, %15, %34 : vector<8x128xi32>
    %36 = arith.extui %35 : vector<8x128xi1> to vector<8x128xi32>
    %37 = arith.sitofp %36 : vector<8x128xi32> to vector<8x128xf32>
    %38 = arith.mulf %32, %37 : vector<8x128xf32>
    %cst_21 = arith.constant dense<0.000000e+00> : vector<8xf32>
    %39 = vector.multi_reduction <add>, %38, %cst_21 [1] : vector<8x128xf32> to vector<8xf32>
    %40 = vector.shape_cast %39 : vector<8xf32> to vector<8x1xf32>
    %c0_22 = arith.constant 0 : index
    %c0_23 = arith.constant 0 : index
    %41 = vector.load %arg5[%c0_22, %c0_23] : memref<1x128xf32, #tpu.memory_space<vmem>>, vector<1x128xf32>
    %42 = vector.broadcast %41 : vector<1x128xf32> to vector<8x128xf32>
    %43 = arith.mulf %42, %37 : vector<8x128xf32>
    %cst_24 = arith.constant dense<0.000000e+00> : vector<8xf32>
    %44 = vector.multi_reduction <add>, %43, %cst_24 [1] : vector<8x128xf32> to vector<8xf32>
    %45 = vector.shape_cast %44 : vector<8xf32> to vector<8x1xf32>
    %c0_i32 = arith.constant 0 : i32
    %46 = vector.broadcast %c0_i32 : i32 to vector<8x128xi32>
    %47 = arith.cmpi eq, %15, %46 : vector<8x128xi32>
    %48 = arith.mulf %45, %40 : vector<8x1xf32>
    %c1_i32 = arith.constant 1 : i32
    %49 = vector.broadcast %c1_i32 : i32 to vector<8x128xi32>
    %50 = arith.cmpi eq, %15, %49 : vector<8x128xi32>
    %cst_25 = arith.constant 0.000000e+00 : f32
    %51 = vector.shape_cast %45 : vector<8x1xf32> to vector<8x1xf32>
    %52 = vector.broadcast %51 : vector<8x1xf32> to vector<8x128xf32>
    %53 = vector.broadcast %cst_25 : f32 to vector<8x128xf32>
    %54 = arith.select %50, %52, %53 : vector<8x128xi1>, vector<8x128xf32>
    %55 = vector.shape_cast %48 : vector<8x1xf32> to vector<8x1xf32>
    %56 = vector.broadcast %55 : vector<8x1xf32> to vector<8x128xf32>
    %57 = arith.select %47, %56, %54 : vector<8x128xi1>, vector<8x128xf32>
    %c0_26 = arith.constant 0 : index
    %c0_27 = arith.constant 0 : index
    %58 = vector.load %arg9[%c0_26, %c0_27] : memref<8x128xf32, #tpu.memory_space<vmem>>, vector<8x128xf32>
    tpu.vector_store %arg9[%c0_26, %c0_27], %57 {strides = array<i32>} : memref<8x128xf32, #tpu.memory_space<vmem>>, vector<8x128xf32>,
    return
  }
  func.func @transform_0(%arg0: i32) -> (i32, i32, i32) {
    %c0_i32 = arith.constant 0 : i32
    %c0_i32_0 = arith.constant 0 : i32
    %c0_i32_1 = arith.constant 0 : i32
    return %arg0, %c0_i32, %c0_i32_0 : i32, i32, i32
  }
  func.func @transform_1(%arg0: i32) -> (i32, i32, i32) {
    %c0_i32 = arith.constant 0 : i32
    %c0_i32_0 = arith.constant 0 : i32
    %c0_i32_1 = arith.constant 0 : i32
    return %arg0, %c0_i32, %c0_i32_0 : i32, i32, i32
  }
  func.func @transform_2(%arg0: i32) -> (i32, i32) {
    %c0_i32 = arith.constant 0 : i32
    %c0_i32_0 = arith.constant 0 : i32
    %c0_i32_1 = arith.constant 0 : i32
    return %c0_i32, %c0_i32_0 : i32, i32
  }
  func.func @transform_3(%arg0: i32) -> (i32, i32) {
    %c0_i32 = arith.constant 0 : i32
    %c0_i32_0 = arith.constant 0 : i32
    %c0_i32_1 = arith.constant 0 : i32
    return %c0_i32, %c0_i32_0 : i32, i32
  }
  func.func @transform_4(%arg0: i32) -> (i32, i32) {
    %c0_i32 = arith.constant 0 : i32
    %c0_i32_0 = arith.constant 0 : i32
    %c0_i32_1 = arith.constant 0 : i32
    return %c0_i32, %c0_i32_0 : i32, i32
  }
  func.func @transform_5(%arg0: i32) -> (i32, i32) {
    %c0_i32 = arith.constant 0 : i32
    %c0_i32_0 = arith.constant 0 : i32
    return %arg0, %c0_i32 : i32, i32
  }
  func.func @transform_6(%arg0: i32) -> (i32, i32) {
    %c0_i32 = arith.constant 0 : i32
    %c0_i32_0 = arith.constant 0 : i32
    return %arg0, %c0_i32 : i32, i32
  }
  func.func @transform_7(%arg0: i32) -> (i32, i32) {
    %c0_i32 = arith.constant 0 : i32
    %c0_i32_0 = arith.constant 0 : i32
    return %arg0, %c0_i32 : i32, i32
  }
  func.func @transform_8(%arg0: i32) -> (i32, i32) {
    %c0_i32 = arith.constant 0 : i32
    %c0_i32_0 = arith.constant 0 : i32
    return %arg0, %c0_i32 : i32, i32
  }
}

</mosaic_0001>

<llo_original>
// kernel: weighted_loss_model_forward.1
$region0: #{weighted_loss_model_forward.1}
  #allocation0 [shape = 'u32[]', space=smem, size = 0x4, offset = 0x4, fixed_abs, tag = 'smem constant byte address 0x4 - core index']
  #allocation1 [shape = 'u32[144,128]{1,0:T(1,128)}', space=vmem, size = 0x12000, scoped, tag = 'internal scratch']
  %s0 = inlined_call_operand.vmem [shape: f32[8,8,32], index: 0, kind: input, shape index: {}]
  %s1 = inlined_call_operand.vmem [shape: f32[8,8,1], index: 1, kind: input, shape index: {}]
  %s2 = inlined_call_operand.vmem [shape: f32[32,128], index: 2, kind: input, shape index: {}]
  %s3 = inlined_call_operand.vmem [shape: f32[1,128], index: 3, kind: input, shape index: {}]
  %s4 = inlined_call_operand.vmem [shape: f32[1,128], index: 4, kind: input, shape index: {}]
  %s5 = inlined_call_operand.vmem [shape: f32[8,128], index: 5, kind: input, shape index: {}]
  %s6 = inlined_call_operand.vmem [shape: s32[8,1], index: 6, kind: input, shape index: {}]
  %s7 = inlined_call_operand.vmem [shape: f32[8,128], index: 7, kind: output, shape index: {0}]
  %s8 = inlined_call_operand.vmem [shape: f32[8,128], index: 8, kind: output, shape index: {1}]
  %9 = xla_tuple %s7, %s8
  %s10 = sld [smem:[#allocation0]]
  $region46: #{weighted_loss_model_forward.1} parent=0
    _
  %s12 = ssub.s32 1, %s10
  %s13 = scalar_select 0, %s12, %s10
  // Predicated region
  $region2: #{weighted_loss_model_forward.1} parent=0 // pred_check
    _
  $region3: #{weighted_loss_model_forward.1} parent=0 // pred_check_branch
    %15 = sbr.rel (0) target = $region5
  $region4: #{weighted_loss_model_forward.1} parent=0 // pred_region
    _
  $region5: #{weighted_loss_model_forward.1} parent=0 // pred_fallthru
    _
  // Predicated region
  $region6: #{weighted_loss_model_forward.1} parent=0 // pred_check
    _
  $region7: #{weighted_loss_model_forward.1} parent=0 // pred_check_branch
    %17 = sbr.rel (0) target = $region9
  $region8: #{weighted_loss_model_forward.1} parent=0 // pred_region
    _
  $region9: #{weighted_loss_model_forward.1} parent=0 // pred_fallthru
    _
  // Predicated region
  $region10: #{weighted_loss_model_forward.1} parent=0 // pred_check
    _
  $region11: #{weighted_loss_model_forward.1} parent=0 // pred_check_branch
    %19 = sbr.rel (0) target = $region13
  $region12: #{weighted_loss_model_forward.1} parent=0 // pred_region
    _
  $region13: #{weighted_loss_model_forward.1} parent=0 // pred_fallthru
    _
  // Predicated region
  $region14: #{weighted_loss_model_forward.1} parent=0 // pred_check
    _
  $region15: #{weighted_loss_model_forward.1} parent=0 // pred_check_branch
    %21 = sbr.rel (0) target = $region17
  $region16: #{weighted_loss_model_forward.1} parent=0 // pred_region
    _
  $region17: #{weighted_loss_model_forward.1} parent=0 // pred_fallthru
    _
  // Predicated region
  $region18: #{weighted_loss_model_forward.1} parent=0 // pred_check
    _
  $region19: #{weighted_loss_model_forward.1} parent=0 // pred_check_branch
    %23 = sbr.rel (0) target = $region21
  $region20: #{weighted_loss_model_forward.1} parent=0 // pred_region
    _
  $region21: #{weighted_loss_model_forward.1} parent=0 // pred_fallthru
    _
  // Predicated region
  $region22: #{weighted_loss_model_forward.1} parent=0 // pred_check
    _
  $region23: #{weighted_loss_model_forward.1} parent=0 // pred_check_branch
    %25 = sbr.rel (0) target = $region25
  $region24: #{weighted_loss_model_forward.1} parent=0 // pred_region
    _
  $region25: #{weighted_loss_model_forward.1} parent=0 // pred_fallthru
    _
  // Predicated region
  $region26: #{weighted_loss_model_forward.1} parent=0 // pred_check
    _
  $region27: #{weighted_loss_model_forward.1} parent=0 // pred_check_branch
    %27 = sbr.rel (0) target = $region29
  $region28: #{weighted_loss_model_forward.1} parent=0 // pred_region
    _
  $region29: #{weighted_loss_model_forward.1} parent=0 // pred_fallthru
    _
  %v28 = vld [vmem:[%s1] sm:$0xff]
  %v29 = vld [vmem:[%s1 + $0x8] sm:$0xff]
  %v30 = vld [vmem:[%s1 + $0x10] sm:$0xff]
  %v31 = vld [vmem:[%s1 + $0x18] sm:$0xff]
  %v32 = vld [vmem:[%s1 + $0x20] sm:$0xff]
  %v33 = vld [vmem:[%s1 + $0x28] sm:$0xff]
  %v34 = vld [vmem:[%s1 + $0x30] sm:$0xff]
  %v35 = vld [vmem:[%s1 + $0x38] sm:$0xff]
  %vm36 = vcmask 7168
  %v37 = vsel %vm36, %v28, 0.0
  %v38 = vrot.slane %v37, 4
  %v39 = vadd.f32 %v37, %v38
  %v40 = vrot.slane %v39, 2
  %v41 = vadd.f32 %v39, %v40
  %v42 = vrot.slane %v41, 1
  %v43 = vadd.f32 %v41, %v42
  %v44 = vsel %vm36, %v29, 0.0
  %v45 = vrot.slane %v44, 4
  %v46 = vadd.f32 %v44, %v45
  %v47 = vrot.slane %v46, 2
  %v48 = vadd.f32 %v46, %v47
  %v49 = vrot.slane %v48, 1
  %v50 = vadd.f32 %v48, %v49
  %v51 = vsel %vm36, %v30, 0.0
  %v52 = vrot.slane %v51, 4
  %v53 = vadd.f32 %v51, %v52
  %v54 = vrot.slane %v53, 2
  %v55 = vadd.f32 %v53, %v54
  %v56 = vrot.slane %v55, 1
  %v57 = vadd.f32 %v55, %v56
  %v58 = vsel %vm36, %v31, 0.0
  %v59 = vrot.slane %v58, 4
  %v60 = vadd.f32 %v58, %v59
  %v61 = vrot.slane %v60, 2
  %v62 = vadd.f32 %v60, %v61
  %v63 = vrot.slane %v62, 1
  %v64 = vadd.f32 %v62, %v63
  %v65 = vsel %vm36, %v32, 0.0
  %v66 = vrot.slane %v65, 4
  %v67 = vadd.f32 %v65, %v66
  %v68 = vrot.slane %v67, 2
  %v69 = vadd.f32 %v67, %v68
  %v70 = vrot.slane %v69, 1
  %v71 = vadd.f32 %v69, %v70
  %v72 = vsel %vm36, %v33, 0.0
  %v73 = vrot.slane %v72, 4
  %v74 = vadd.f32 %v72, %v73
  %v75 = vrot.slane %v74, 2
  %v76 = vadd.f32 %v74, %v75
  %v77 = vrot.slane %v76, 1
  %v78 = vadd.f32 %v76, %v77
  %v79 = vsel %vm36, %v34, 0.0
  %v80 = vrot.slane %v79, 4
  %v81 = vadd.f32 %v79, %v80
  %v82 = vrot.slane %v81, 2
  %v83 = vadd.f32 %v81, %v82
  %v84 = vrot.slane %v83, 1
  %v85 = vadd.f32 %v83, %v84
  %v86 = vsel %vm36, %v35, 0.0
  %v87 = vrot.slane %v86, 4
  %v88 = vadd.f32 %v86, %v87
  %v89 = vrot.slane %v88, 2
  %v90 = vadd.f32 %v88, %v89
  %v91 = vrot.slane %v90, 1
  %v92 = vadd.f32 %v90, %v91
  %v93 = vmax.f32 %v43, 1.0
  %v94 = vmax.f32 %v50, 1.0
  %v95 = vmax.f32 %v57, 1.0
  %v96 = vmax.f32 %v64, 1.0
  %v97 = vmax.f32 %v71, 1.0
  %v98 = vmax.f32 %v78, 1.0
  %v99 = vmax.f32 %v85, 1.0
  %v100 = vmax.f32 %v92, 1.0
  %v101 = vld [vmem:[%s0] sm:$0xff]
  %v102 = vld [vmem:[%s0 + $0x8] sm:$0xff]
  %v103 = vld [vmem:[%s0 + $0x10] sm:$0xff]
  %v104 = vld [vmem:[%s0 + $0x18] sm:$0xff]
  %v105 = vld [vmem:[%s0 + $0x20] sm:$0xff]
  %v106 = vld [vmem:[%s0 + $0x28] sm:$0xff]
  %v107 = vld [vmem:[%s0 + $0x30] sm:$0xff]
  %v108 = vld [vmem:[%s0 + $0x38] sm:$0xff]
  %110 = vset.pattern.permute.xlu0 0
  %111 = vperm.xlu0 %110, %v28
  %v112 = vpop.permute.xlu0 %111
  %115 = vset.pattern.permute.xlu0 0
  %116 = vperm.xlu0 %115, %v29
  %v117 = vpop.permute.xlu0 %116
  %120 = vset.pattern.permute.xlu0 0
  %121 = vperm.xlu0 %120, %v30
  %v122 = vpop.permute.xlu0 %121
  %125 = vset.pattern.permute.xlu0 0
  %126 = vperm.xlu0 %125, %v31
  %v127 = vpop.permute.xlu0 %126
  %130 = vset.pattern.permute.xlu0 0
  %131 = vperm.xlu0 %130, %v32
  %v132 = vpop.permute.xlu0 %131
  %135 = vset.pattern.permute.xlu0 0
  %136 = vperm.xlu0 %135, %v33
  %v137 = vpop.permute.xlu0 %136
  %140 = vset.pattern.permute.xlu0 0
  %141 = vperm.xlu0 %140, %v34
  %v142 = vpop.permute.xlu0 %141
  %145 = vset.pattern.permute.xlu0 0
  %146 = vperm.xlu0 %145, %v35
  %v147 = vpop.permute.xlu0 %146
  %v149 = vmul.f32 %v101, %v112
  %v150 = vmul.f32 %v102, %v117
  %v151 = vmul.f32 %v103, %v122
  %v152 = vmul.f32 %v104, %v127
  %v153 = vmul.f32 %v105, %v132
  %v154 = vmul.f32 %v106, %v137
  %v155 = vmul.f32 %v107, %v142
  %v156 = vmul.f32 %v108, %v147
  %vm157 = vcmask 261120
  %v158 = vsel %vm157, %v149, 0.0
  %v159 = vrot.slane %v158, 4
  %v160 = vadd.f32 %v158, %v159
  %v161 = vrot.slane %v160, 2
  %v162 = vadd.f32 %v160, %v161
  %v163 = vrot.slane %v162, 1
  %v164 = vadd.f32 %v162, %v163
  %v165 = vsel %vm157, %v150, 0.0
  %v166 = vrot.slane %v165, 4
  %v167 = vadd.f32 %v165, %v166
  %v168 = vrot.slane %v167, 2
  %v169 = vadd.f32 %v167, %v168
  %v170 = vrot.slane %v169, 1
  %v171 = vadd.f32 %v169, %v170
  %v172 = vsel %vm157, %v151, 0.0
  %v173 = vrot.slane %v172, 4
  %v174 = vadd.f32 %v172, %v173
  %v175 = vrot.slane %v174, 2
  %v176 = vadd.f32 %v174, %v175
  %v177 = vrot.slane %v176, 1
  %v178 = vadd.f32 %v176, %v177
  %v179 = vsel %vm157, %v152, 0.0
  %v180 = vrot.slane %v179, 4
  %v181 = vadd.f32 %v179, %v180
  %v182 = vrot.slane %v181, 2
  %v183 = vadd.f32 %v181, %v182
  %v184 = vrot.slane %v183, 1
  %v185 = vadd.f32 %v183, %v184
  %v186 = vsel %vm157, %v153, 0.0
  %v187 = vrot.slane %v186, 4
  %v188 = vadd.f32 %v186, %v187
  %v189 = vrot.slane %v188, 2
  %v190 = vadd.f32 %v188, %v189
  %v191 = vrot.slane %v190, 1
  %v192 = vadd.f32 %v190, %v191
  %v193 = vsel %vm157, %v154, 0.0
  %v194 = vrot.slane %v193, 4
  %v195 = vadd.f32 %v193, %v194
  %v196 = vrot.slane %v195, 2
  %v197 = vadd.f32 %v195, %v196
  %v198 = vrot.slane %v197, 1
  %v199 = vadd.f32 %v197, %v198
  %v200 = vsel %vm157, %v155, 0.0
  %v201 = vrot.slane %v200, 4
  %v202 = vadd.f32 %v200, %v201
  %v203 = vrot.slane %v202, 2
  %v204 = vadd.f32 %v202, %v203
  %v205 = vrot.slane %v204, 1
  %v206 = vadd.f32 %v204, %v205
  %v207 = vsel %vm157, %v156, 0.0
  %v208 = vrot.slane %v207, 4
  %v209 = vadd.f32 %v207, %v208
  %v210 = vrot.slane %v209, 2
  %v211 = vadd.f32 %v209, %v210
  %v212 = vrot.slane %v211, 1
  %v213 = vadd.f32 %v211, %v212
  %215 = vset.pattern.permute.xlu0 0
  %216 = vperm.xlu0 %215, %v93
  %v217 = vpop.permute.xlu0 %216
  %220 = vset.pattern.permute.xlu0 0
  %221 = vperm.xlu0 %220, %v94
  %v222 = vpop.permute.xlu0 %221
  %225 = vset.pattern.permute.xlu0 0
  %226 = vperm.xlu0 %225, %v95
  %v227 = vpop.permute.xlu0 %226
  %230 = vset.pattern.permute.xlu0 0
  %231 = vperm.xlu0 %230, %v96
  %v232 = vpop.permute.xlu0 %231
  %235 = vset.pattern.permute.xlu0 0
  %236 = vperm.xlu0 %235, %v97
  %v237 = vpop.permute.xlu0 %236
  %240 = vset.pattern.permute.xlu0 0
  %241 = vperm.xlu0 %240, %v98
  %v242 = vpop.permute.xlu0 %241
  %245 = vset.pattern.permute.xlu0 0
  %246 = vperm.xlu0 %245, %v99
  %v247 = vpop.permute.xlu0 %246
  %250 = vset.pattern.permute.xlu0 0
  %251 = vperm.xlu0 %250, %v100
  %v252 = vpop.permute.xlu0 %251
  %v254 = vrcp.pop %v217
  %v255 = vmul.f32 %v164, %v254
  %v256 = vrcp.pop %v222
  %v257 = vmul.f32 %v171, %v256
  %v258 = vrcp.pop %v227
  %v259 = vmul.f32 %v178, %v258
  %v260 = vrcp.pop %v232
  %v261 = vmul.f32 %v185, %v260
  %v262 = vrcp.pop %v237
  %v263 = vmul.f32 %v192, %v262
  %v264 = vrcp.pop %v242
  %v265 = vmul.f32 %v199, %v264
  %v266 = vrcp.pop %v247
  %v267 = vmul.f32 %v206, %v266
  %v268 = vrcp.pop %v252
  %v269 = vmul.f32 %v213, %v268
  %v270 = vld [vmem:[%s2] sm:$0xff]
  %v271 = vld [vmem:[%s2 + $0x8] sm:$0xff]
  %v272 = vld [vmem:[%s2 + $0x10] sm:$0xff]
  %v273 = vld [vmem:[%s2 + $0x18] sm:$0xff]
  %v274 = vld [vmem:[%s3] sm:$0x1]
  %v276 = vlaneseq
  %v277 = vshrl.u32 %v276, 7
  %v278 = vsub.s32 0, %v277
  %v279 = vrot.slane %v274, %v278
  %vm289 = vcmask 1041409
  %v290 = vsel %vm289, %v257, %v255
  %vm291 = vcmask 1042434
  %v292 = vsel %vm291, %v259, %v290
  %vm293 = vcmask 1043459
  %v294 = vsel %vm293, %v261, %v292
  %vm295 = vcmask 1044484
  %v296 = vsel %vm295, %v263, %v294
  %vm297 = vcmask 1045509
  %v298 = vsel %vm297, %v265, %v296
  %vm299 = vcmask 1046534
  %v300 = vsel %vm299, %v267, %v298
  %vm301 = vcmask 1047559
  %v302 = vsel %vm301, %v269, %v300
  %v303 = vsel %vm157, %v302, 0
  %305 = vmatprep.subr.mxu0 0.0
  %306 = vmatpush1.msra.mxu0 %v270
  %307 = vmatprep.subr.mxu0 0.0
  %308 = vmatpush1.msra.mxu0 %v271
  %309 = vmatprep.subr.mxu0 0.0
  %310 = vmatpush1.msra.mxu0 %v272
  %311 = vmatprep.subr.mxu0 0.0
  %312 = vmatpush1.msra.mxu0 %v273
  %313 = vmatprep.subr.mxu0 0.0
  %314 = vmatpush1.msra.mxu0 0.0
  %315 = vmatprep.subr.mxu0 0.0
  %316 = vmatpush1.msra.mxu0 0.0
  %317 = vmatprep.subr.mxu0 0.0
  %318 = vmatpush1.msra.mxu0 0.0
  %319 = vmatprep.subr.mxu0 0.0
  %320 = vmatpush1.msra.mxu0 0.0
  %321 = vmatprep.subr.mxu0 0.0
  %322 = vmatpush1.msra.mxu0 0.0
  %323 = vmatprep.subr.mxu0 0.0
  %324 = vmatpush1.msra.mxu0 0.0
  %325 = vmatprep.subr.mxu0 0.0
  %326 = vmatpush1.msra.mxu0 0.0
  %327 = vmatprep.subr.mxu0 0.0
  %328 = vmatpush1.msra.mxu0 0.0
  %329 = vmatprep.subr.mxu0 0.0
  %330 = vmatpush1.msra.mxu0 0.0
  %331 = vmatprep.subr.mxu0 0.0
  %332 = vmatpush1.msra.mxu0 0.0
  %333 = vmatprep.subr.mxu0 0.0
  %334 = vmatpush1.msra.mxu0 0.0
  %335 = vmatprep.subr.mxu0 0.0
  %336 = vmatpush1.msra.mxu0 0.0
  %337 = vmatprep.subr.mxu0 0.0
  %338 = vmatpush1.msra.mxu0 0.0
  %339 = vmatprep.subr.mxu0 0.0
  %340 = vmatpush1.msra.mxu0 0.0
  %341 = vmatprep.subr.mxu0 0.0
  %342 = vmatpush1.msra.mxu0 0.0
  %343 = vmatprep.subr.mxu0 0.0
  %344 = vmatpush1.msra.mxu0 0.0
  %345 = vmatprep.subr.mxu0 0.0
  %346 = vmatpush1.msra.mxu0 0.0
  %347 = vmatprep.subr.mxu0 0.0
  %348 = vmatpush1.msra.mxu0 0.0
  %349 = vmatprep.subr.mxu0 0.0
  %350 = vmatpush1.msra.mxu0 0.0
  %351 = vmatprep.subr.mxu0 0.0
  %352 = vmatpush1.msra.mxu0 0.0
  %353 = vmatprep.subr.mxu0 0.0
  %354 = vmatpush1.msra.mxu0 0.0
  %355 = vmatprep.subr.mxu0 0.0
  %356 = vmatpush1.msra.mxu0 0.0
  %357 = vmatprep.subr.mxu0 0.0
  %358 = vmatpush1.msra.mxu0 0.0
  %359 = vmatprep.subr.mxu0 0.0
  %360 = vmatpush1.msra.mxu0 0.0
  %361 = vmatprep.subr.mxu0 0.0
  %362 = vmatpush1.msra.mxu0 0.0
  %363 = vmatprep.subr.mxu0 0.0
  %364 = vmatpush1.msra.mxu0 0.0
  %365 = vmatprep.subr.mxu0 0.0
  %366 = vmatpush1.msra.mxu0 0.0
  %367 = vmatprep.subr.mxu0 0.0
  %368 = vmatpush1.msra.mxu0 0.0
  %369 = vmatprep.mubr.f32.mxu0 0.0
  %370 = vmatmul.mubr.f32.gmra.mrb[0].mxu0 %v303
  %v371 = vpop.f32.mrb[0].mxu0
  %v372 = vadd.f32 %v279, %v371
  %v373 = vpop.f32.mrb[0].mxu0
  %374 = vdwg.mxu0
  %v375 = vlaneseq
  %v376 = vand.u32 %v375, 127
  %v377 = vld [vmem:[%s5] sm:$0xff]
  %v378 = vmul.f32 %v372, %v377
  %vm379 = vcmp.lt.s32.totalorder %v376, 4
  %v380 = vsel %vm379, %v378, -1e+30
  %381 = vst [vmem:[%s7] sm:$0xff] %v380
  %382 = vmax.xlane.f32.xlu0 %v380
  %v383 = vpop.xlane.xlu0 %382
  %v384 = vsub.f32 %v380, %v383
  %v385 = vmul.f32 %v384, 1.442695
  %v386 = vpow.pop %v385
  %387 = vadd.xlane.f32.xlu0 %v386
  %v388 = vpop.xlane.xlu0 %387
  %v389 = vlog2.pop %v388
  %v390 = vmul.f32 %v389, 0.6931472
  %v391 = vsub.f32 %v384, %v390
  %v392 = vld [vmem:[%s6] sm:$0xff]
  %393 = vset.pattern.permute.xlu0 0
  %394 = vperm.xlu0 %393, %v392
  %v395 = vpop.permute.xlu0 %394
  %vm396 = vcmp.eq.s32.totalorder %v376, %v395
  %v397 = vsel %vm396, 1, 0
  %v398 = vcvt.s32.f32 %v397
  %v399 = vmul.f32 %v391, %v398
  %400 = vadd.xlane.f32.xlu0 %v399
  %v401 = vpop.xlane.xlu0 %400
  %v402 = vld [vmem:[%s4] sm:$0x1]
  %v404 = vlaneseq
  %v405 = vshrl.u32 %v404, 7
  %v406 = vsub.s32 0, %v405
  %v407 = vrot.slane %v402, %v406
  %v409 = vmul.f32 %v407, %v398
  %410 = vadd.xlane.f32.xlu0 %v409
  %v411 = vpop.xlane.xlu0 %410
  %vm412 = vcmp.eq.s32.totalorder %v376, 0
  %v413 = vmul.f32 %v411, %v401
  %vm414 = vcmp.eq.s32.totalorder %v376, 1
  %v415 = vsel %vm414, %v411, 0.0
  %v416 = vsel %vm412, %v413, %v415
  %417 = vst [vmem:[%s8] sm:$0xff] %v416
  // Predicated region
  $region30: #{weighted_loss_model_forward.1} parent=0 // pred_check
    _
  $region31: #{weighted_loss_model_forward.1} parent=0 // pred_check_branch
    %419 = sbr.rel (0) target = $region33
  $region32: #{weighted_loss_model_forward.1} parent=0 // pred_region
    _
  $region33: #{weighted_loss_model_forward.1} parent=0 // pred_fallthru
    _
  // Predicated region
  $region34: #{weighted_loss_model_forward.1} parent=0 // pred_check
    _
  $region35: #{weighted_loss_model_forward.1} parent=0 // pred_check_branch
    %421 = sbr.rel (0) target = $region37
  $region36: #{weighted_loss_model_forward.1} parent=0 // pred_region
    _
  $region37: #{weighted_loss_model_forward.1} parent=0 // pred_fallthru
    _
  // Predicated region
  $region38: #{weighted_loss_model_forward.1} parent=0 // pred_check
    _
  $region39: #{weighted_loss_model_forward.1} parent=0 // pred_check_branch
    %423 = sbr.rel (0) target = $region41
  $region40: #{weighted_loss_model_forward.1} parent=0 // pred_region
    _
  $region41: #{weighted_loss_model_forward.1} parent=0 // pred_fallthru
    _
  // Predicated region
  $region42: #{weighted_loss_model_forward.1} parent=0 // pred_check
    _
  $region43: #{weighted_loss_model_forward.1} parent=0 // pred_check_branch
    %425 = sbr.rel (0) target = $region45
  $region44: #{weighted_loss_model_forward.1} parent=0 // pred_region
    _
  $region45: #{weighted_loss_model_forward.1} parent=0 // pred_fallthru
    _

</llo_original>
